<compile_context>
chip_gen: v7x
topology: tpu7x:2x2x1
jax: 0.10.0
libtpu: 0.0.40
codegen_flags: <defaults>
</compile_context>

<pallas_src>
import functools

import jax
import jax.numpy as jnp
from jax.experimental import pallas as pl
from jax.experimental.pallas import tpu as pltpu


def _round_up(x, m):
    return ((x + m - 1) // m) * m


def _feasibility_kernel(vel_ref, traj_ref, out_ref, *,
                        max_velocity, max_acceleration, half_x, half_y,
                        inv_dt, t_valid):
    """Partial constraint-violation sums for one batch tile.

    vel_ref / traj_ref: (3, TB, T_pad) f32 blocks (channel, batch-tile, time).
    out_ref:            (8, 128) f32 block; lanes 0/1/2 hold the velocity /
                        acceleration / boundary partial sums for this tile.
    Padded batch rows and padded time columns are zero and contribute nothing
    (relu of a negative constant is zero); the acceleration wrap-around and
    padded columns are masked explicitly.
    """
    vx, vy, vz = vel_ref[0], vel_ref[1], vel_ref[2]
    tx, ty, tz = traj_ref[0], traj_ref[1], traj_ref[2]
    t_pad = vx.shape[-1]
    last_axis = vx.ndim - 1  # pltpu.roll requires a non-negative axis index.

    # --- velocity constraint: sum(relu(||v|| - max_velocity)) ----------------
    vmag = jnp.sqrt(vx * vx + vy * vy + vz * vz)
    vel_sum = jnp.sum(jnp.maximum(vmag - max_velocity, 0.0), keepdims=True)

    # --- acceleration constraint: finite difference along time ---------------
    # next-minus-current via an XLU roll (roll by T-1 == shift of -1); the
    # wrap-around / padded columns (col >= t_valid-1) are masked before summing.
    dvx = pltpu.roll(vx, shift=t_pad - 1, axis=last_axis) - vx
    dvy = pltpu.roll(vy, shift=t_pad - 1, axis=last_axis) - vy
    dvz = pltpu.roll(vz, shift=t_pad - 1, axis=last_axis) - vz
    amag = jnp.sqrt(dvx * dvx + dvy * dvy + dvz * dvz) * inv_dt
    col = jax.lax.broadcasted_iota(jnp.int32, amag.shape, last_axis)
    acc_viol = jnp.where(col < t_valid - 1,
                         jnp.maximum(amag - max_acceleration, 0.0), 0.0)
    acc_sum = jnp.sum(acc_viol, keepdims=True)

    # --- boundary constraint --------------------------------------------------
    bnd = (jnp.maximum(jnp.abs(tx) - half_x, 0.0)
           + jnp.maximum(jnp.abs(ty) - half_y, 0.0)
           + jnp.maximum(-tz, 0.0))
    bnd_sum = jnp.sum(bnd, keepdims=True)

    # Lane-dense write-back: one unmasked (8,128) store per tile.
    lane = jax.lax.broadcasted_iota(jnp.int32, (8, 128), 1)
    out = jnp.where(lane == 0, vel_sum, 0.0)
    out = jnp.where(lane == 1, acc_sum, out)
    out = jnp.where(lane == 2, bnd_sum, out)
    out_ref[...] = out


def _feasibility_means_jnp(trajectories, velocities, *, max_velocity,
                           max_acceleration, half_x, half_y, dt):
    """Pure-jnp path (small-problem fallback and verification reference)."""
    vmag = jnp.sqrt(jnp.sum(velocities * velocities, axis=-1))
    vel = jnp.mean(jnp.maximum(vmag - max_velocity, 0.0))
    acc = (velocities[:, 1:] - velocities[:, :-1]) / dt
    amag = jnp.sqrt(jnp.sum(acc * acc, axis=-1))
    accl = jnp.mean(jnp.maximum(amag - max_acceleration, 0.0))
    xv = jnp.maximum(jnp.abs(trajectories[..., 0]) - half_x, 0.0)
    yv = jnp.maximum(jnp.abs(trajectories[..., 1]) - half_y, 0.0)
    zv = jnp.maximum(-trajectories[..., 2], 0.0)
    bnd = jnp.mean(xv + yv + zv)
    return vel, accl, bnd


def _pick_batch_block(B, t_pad):
    # Keep both stacked f32 inputs (6 planes) for one tile <= ~4 MiB, so the
    # double-buffered working set (~8 MiB) fits v5e's 16 MiB scoped-VMEM default
    # and leaves ample headroom on v7x's 64 MiB physical VMEM.
    bytes_per_row = 6 * t_pad * 4
    tb = (4 * 1024 * 1024) // max(bytes_per_row, 1)
    tb = max(8, min(512, (tb // 8) * 8))
    return min(tb, _round_up(B, 8))


def trajectory_feasibility_loss(trajectories,
                                velocities,
                                masks=None,
                                max_velocity=137.0,
                                max_acceleration=100.0,
                                court_bounds=(13.4, 6.1, 8.0),
                                fps=30,
                                use_pallas=None,
                                batch_block=None):
    """JAX/Pallas equivalent of TrajectoryFeasibilityLoss.forward."""
    trajectories = trajectories.astype(jnp.float32)
    velocities = velocities.astype(jnp.float32)
    B, T, _ = velocities.shape
    dt = 1.0 / float(fps)
    half_x = float(court_bounds[0]) / 2.0
    half_y = float(court_bounds[1]) / 2.0

    if use_pallas is None:
        # Fixed pallas_call / per-step overhead dominates tiny problems.
        use_pallas = (B * T) >= 4096

    if not use_pallas:
        vel_l, acc_l, bnd_l = _feasibility_means_jnp(
            trajectories, velocities, max_velocity=max_velocity,
            max_acceleration=max_acceleration, half_x=half_x, half_y=half_y,
            dt=dt)
    else:
        # One fused transpose per array (vs six strided channel gathers).
        vel_s = jnp.transpose(velocities, (2, 0, 1))      # (3, B, T)
        traj_s = jnp.transpose(trajectories, (2, 0, 1))   # (3, B, T)

        t_pad = _round_up(T, 128)                          # lane-dense time axis
        tb = batch_block if batch_block is not None else _pick_batch_block(B, t_pad)
        tb = max(8, _round_up(int(tb), 8))                 # 8-sublane aligned tile
        b_pad = _round_up(B, tb)
        if b_pad != B or t_pad != T:
            pad = ((0, 0), (0, b_pad - B), (0, t_pad - T))
            vel_s = jnp.pad(vel_s, pad)
            traj_s = jnp.pad(traj_s, pad)
        num_blocks = b_pad // tb

        kernel = functools.partial(
            _feasibility_kernel,
            max_velocity=float(max_velocity),
            max_acceleration=float(max_acceleration),
            half_x=half_x, half_y=half_y,
            inv_dt=1.0 / dt, t_valid=T)

        in_spec = pl.BlockSpec((3, tb, t_pad), lambda i: (0, i, 0))
        out_spec = pl.BlockSpec((None, 8, 128), lambda i: (i, 0, 0))

        partials = pl.pallas_call(
            kernel,
            out_shape=jax.ShapeDtypeStruct((num_blocks, 8, 128), jnp.float32),
            grid=(num_blocks,),
            in_specs=[in_spec, in_spec],
            out_specs=out_spec,
            compiler_params=pltpu.CompilerParams(
                dimension_semantics=("parallel",)),
        )(vel_s, traj_s)

        totals = jnp.sum(partials[:, 0, :], axis=0)        # (128,) lane sums
        vel_l = totals[0] / float(B * T)
        acc_l = totals[1] / float(B * (T - 1))
        bnd_l = totals[2] / float(B * T)

    losses = {
        "loss_velocity_constraint": vel_l,
        "loss_acceleration_constraint": acc_l,
        "loss_boundary_constraint": bnd_l,
    }

    if masks is not None:
        # Faithful to the PyTorch module: broadcast the scalar loss over the
        # mask, sum, and renormalize (mathematically an identity).
        # TODO(synk): if the intent is to exclude padded timesteps, the mask
        # must be applied per-element inside the kernel and the denominators
        # replaced by sum(mask) equivalents.
        m = masks.astype(jnp.float32)
        msum = jnp.sum(m)
        for key in list(losses.keys()):
            losses[key] = jnp.sum(losses[key] * m) / msum

    losses["loss_feasibility_total"] = (
        losses["loss_velocity_constraint"]
        + losses["loss_acceleration_constraint"]
        + losses["loss_boundary_constraint"])
    return losses


if __name__ == "__main__":
    key = jax.random.PRNGKey(0)
    k1, k2, k3, k4, k5 = jax.random.split(key, 5)
    ref_kw = dict(max_velocity=137.0, max_acceleration=100.0,
                  half_x=13.4 / 2.0, half_y=6.1 / 2.0, dt=1.0 / 30.0)

    # --- small shape (B=2, T=8), Pallas path forced ---------------------------
    B, T = 2, 8
    traj_s = jax.random.normal(k1, (B, T, 3), dtype=jnp.float32) * 5.0
    vel_s = jax.random.normal(k2, (B, T, 3), dtype=jnp.float32) * 80.0

    out_s = trajectory_feasibility_loss(traj_s, vel_s, use_pallas=True)
    out_s = jax.tree_util.tree_map(jax.block_until_ready, out_s)
    rv, ra, rb = _feasibility_means_jnp(traj_s, vel_s, **ref_kw)
    assert jnp.allclose(out_s["loss_velocity_constraint"], rv, rtol=1e-5, atol=1e-5)
    assert jnp.allclose(out_s["loss_acceleration_constraint"], ra, rtol=1e-5, atol=1e-5)
    assert jnp.allclose(out_s["loss_boundary_constraint"], rb, rtol=1e-5, atol=1e-5)
    assert jnp.allclose(out_s["loss_feasibility_total"], rv + ra + rb,
                        rtol=1e-5, atol=1e-5)

    # --- larger shape exercising multiple parallel grid blocks ----------------
    B2, T2 = 24, 256
    traj_l = jax.random.normal(k3, (B2, T2, 3), dtype=jnp.float32) * 5.0
    vel_l = jax.random.normal(k4, (B2, T2, 3), dtype=jnp.float32) * 80.0
    out_l = trajectory_feasibility_loss(traj_l, vel_l, use_pallas=True,
                                        batch_block=8)
    out_l = jax.tree_util.tree_map(jax.block_until_ready, out_l)
    rv2, ra2, rb2 = _feasibility_means_jnp(traj_l, vel_l, **ref_kw)
    assert jnp.allclose(out_l["loss_velocity_constraint"], rv2, rtol=1e-4, atol=1e-4)
    assert jnp.allclose(out_l["loss_acceleration_constraint"], ra2, rtol=1e-4, atol=1e-4)
    assert jnp.allclose(out_l["loss_boundary_constraint"], rb2, rtol=1e-4, atol=1e-4)

    # --- masks path (faithful PyTorch broadcast-then-renormalize == identity) -
    masks = (jax.random.uniform(k5, (B, T)) > 0.3).astype(jnp.float32)
    out_m = trajectory_feasibility_loss(traj_s, vel_s, masks=masks,
                                        use_pallas=True)
    out_m = jax.tree_util.tree_map(jax.block_until_ready, out_m)
    assert jnp.allclose(out_m["loss_feasibility_total"],
                        out_s["loss_feasibility_total"], rtol=1e-5, atol=1e-5)

    # --- auto-gated (jnp fallback) path for tiny inputs ------------------------
    out_auto = trajectory_feasibility_loss(traj_s, vel_s)
    out_auto = jax.tree_util.tree_map(jax.block_until_ready, out_auto)
    assert jnp.allclose(out_auto["loss_feasibility_total"],
                        out_s["loss_feasibility_total"], rtol=1e-5, atol=1e-5)

    print("KERNEL_OK")
</pallas_src>

<mosaic_0001>
module attributes {stable_mosaic.version = 11 : i64} {
  func.func @_feasibility_kernel(%arg0: i32, %arg1: memref<3x8x128xf32, #tpu.memory_space<vmem>>, %arg2: memref<3x8x128xf32, #tpu.memory_space<vmem>>, %arg3: memref<1x8x128xf32, #tpu.memory_space<vmem>>) attributes {dimension_semantics = [#tpu.dimension_semantics<parallel>], iteration_bounds = array<i64: 1>, scalar_prefetch = 0 : i64, scratch_operands = 0 : i64, tpu.core_type = #tpu.core_type<tc>, window_params = [{transform_indices = @transform_0, window_bounds = array<i64: 3, 8, 128>}, {transform_indices = @transform_1, window_bounds = array<i64: 3, 8, 128>}, {transform_indices = @transform_2, window_bounds = array<i64: 1, 8, 128>}]} {
    %c0 = arith.constant 0 : index
    %c0_0 = arith.constant 0 : index
    %c0_1 = arith.constant 0 : index
    %0 = vector.load %arg1[%c0, %c0_0, %c0_1] : memref<3x8x128xf32, #tpu.memory_space<vmem>>, vector<1x8x128xf32>
    %1 = vector.shape_cast %0 : vector<1x8x128xf32> to vector<8x128xf32>
    %c1 = arith.constant 1 : index
    %c0_2 = arith.constant 0 : index
    %c0_3 = arith.constant 0 : index
    %2 = vector.load %arg1[%c1, %c0_2, %c0_3] : memref<3x8x128xf32, #tpu.memory_space<vmem>>, vector<1x8x128xf32>
    %3 = vector.shape_cast %2 : vector<1x8x128xf32> to vector<8x128xf32>
    %c2 = arith.constant 2 : index
    %c0_4 = arith.constant 0 : index
    %c0_5 = arith.constant 0 : index
    %4 = vector.load %arg1[%c2, %c0_4, %c0_5] : memref<3x8x128xf32, #tpu.memory_space<vmem>>, vector<1x8x128xf32>
    %5 = vector.shape_cast %4 : vector<1x8x128xf32> to vector<8x128xf32>
    %c0_6 = arith.constant 0 : index
    %c0_7 = arith.constant 0 : index
    %c0_8 = arith.constant 0 : index
    %6 = vector.load %arg2[%c0_6, %c0_7, %c0_8] : memref<3x8x128xf32, #tpu.memory_space<vmem>>, vector<1x8x128xf32>
    %7 = vector.shape_cast %6 : vector<1x8x128xf32> to vector<8x128xf32>
    %c1_9 = arith.constant 1 : index
    %c0_10 = arith.constant 0 : index
    %c0_11 = arith.constant 0 : index
    %8 = vector.load %arg2[%c1_9, %c0_10, %c0_11] : memref<3x8x128xf32, #tpu.memory_space<vmem>>, vector<1x8x128xf32>
    %9 = vector.shape_cast %8 : vector<1x8x128xf32> to vector<8x128xf32>
    %c2_12 = arith.constant 2 : index
    %c0_13 = arith.constant 0 : index
    %c0_14 = arith.constant 0 : index
    %10 = vector.load %arg2[%c2_12, %c0_13, %c0_14] : memref<3x8x128xf32, #tpu.memory_space<vmem>>, vector<1x8x128xf32>
    %11 = vector.shape_cast %10 : vector<1x8x128xf32> to vector<8x128xf32>
    %12 = arith.mulf %1, %1 : vector<8x128xf32>
    %13 = arith.mulf %3, %3 : vector<8x128xf32>
    %14 = arith.addf %12, %13 : vector<8x128xf32>
    %15 = arith.mulf %5, %5 : vector<8x128xf32>
    %16 = arith.addf %14, %15 : vector<8x128xf32>
    %17 = math.sqrt %16 : vector<8x128xf32>
    %cst = arith.constant 1.370000e+02 : f32
    %18 = vector.broadcast %cst : f32 to vector<8x128xf32>
    %19 = arith.subf %17, %18 : vector<8x128xf32>
    %cst_15 = arith.constant 0.000000e+00 : f32
    %20 = vector.broadcast %cst_15 : f32 to vector<8x128xf32>
    %21 = arith.maximumf %19, %20 : vector<8x128xf32>
    %22 = vector.shape_cast %21 : vector<8x128xf32> to vector<1x8x128xf32>
    %cst_16 = arith.constant dense<0.000000e+00> : vector<1xf32>
    %23 = vector.multi_reduction <add>, %22, %cst_16 [1, 2] : vector<1x8x128xf32> to vector<1xf32>
    %24 = vector.shape_cast %23 : vector<1xf32> to vector<1x1x1xf32>
    %25 = vector.extract %24[0, 0, 0] : f32 from vector<1x1x1xf32>
    %26 = vector.broadcast %25 : f32 to vector<1x1xf32>
    %c127_i32 = arith.constant 127 : i32
    %27 = tpu.dynamic_rotate %1 by %c127_i32 dim 1 : vector<8x128xf32>, i32 -> vector<8x128xf32>
    %28 = arith.subf %27, %1 : vector<8x128xf32>
    %c127_i32_17 = arith.constant 127 : i32
    %29 = tpu.dynamic_rotate %3 by %c127_i32_17 dim 1 : vector<8x128xf32>, i32 -> vector<8x128xf32>
    %30 = arith.subf %29, %3 : vector<8x128xf32>
    %c127_i32_18 = arith.constant 127 : i32
    %31 = tpu.dynamic_rotate %5 by %c127_i32_18 dim 1 : vector<8x128xf32>, i32 -> vector<8x128xf32>
    %32 = arith.subf %31, %5 : vector<8x128xf32>
    %33 = arith.mulf %28, %28 : vector<8x128xf32>
    %34 = arith.mulf %30, %30 : vector<8x128xf32>
    %35 = arith.addf %33, %34 : vector<8x128xf32>
    %36 = arith.mulf %32, %32 : vector<8x128xf32>
    %37 = arith.addf %35, %36 : vector<8x128xf32>
    %38 = math.sqrt %37 : vector<8x128xf32>
    %cst_19 = arith.constant 3.000000e+01 : f32
    %39 = vector.broadcast %cst_19 : f32 to vector<8x128xf32>
    %40 = arith.mulf %38, %39 : vector<8x128xf32>
    %41 = tpu.iota {dimensions = array<i32: 1>} : vector<8x128xi32>
    %c7_i32 = arith.constant 7 : i32
    %42 = vector.broadcast %c7_i32 : i32 to vector<8x128xi32>
    %43 = arith.cmpi slt, %41, %42 : vector<8x128xi32>
    %cst_20 = arith.constant 1.000000e+02 : f32
    %44 = vector.broadcast %cst_20 : f32 to vector<8x128xf32>
    %45 = arith.subf %40, %44 : vector<8x128xf32>
    %cst_21 = arith.constant 0.000000e+00 : f32
    %46 = vector.broadcast %cst_21 : f32 to vector<8x128xf32>
    %47 = arith.maximumf %45, %46 : vector<8x128xf32>
    %cst_22 = arith.constant 0.000000e+00 : f32
    %48 = vector.broadcast %cst_22 : f32 to vector<8x128xf32>
    %49 = arith.select %43, %47, %48 : vector<8x128xi1>, vector<8x128xf32>
    %50 = vector.shape_cast %49 : vector<8x128xf32> to vector<1x8x128xf32>
    %cst_23 = arith.constant dense<0.000000e+00> : vector<1xf32>
    %51 = vector.multi_reduction <add>, %50, %cst_23 [1, 2] : vector<1x8x128xf32> to vector<1xf32>
    %52 = vector.shape_cast %51 : vector<1xf32> to vector<1x1x1xf32>
    %53 = vector.extract %52[0, 0, 0] : f32 from vector<1x1x1xf32>
    %54 = vector.broadcast %53 : f32 to vector<1x1xf32>
    %55 = math.absf %7 : vector<8x128xf32>
    %cst_24 = arith.constant 6.6999998 : f32
    %56 = vector.broadcast %cst_24 : f32 to vector<8x128xf32>
    %57 = arith.subf %55, %56 : vector<8x128xf32>
    %cst_25 = arith.constant 0.000000e+00 : f32
    %58 = vector.broadcast %cst_25 : f32 to vector<8x128xf32>
    %59 = arith.maximumf %57, %58 : vector<8x128xf32>
    %60 = math.absf %9 : vector<8x128xf32>
    %cst_26 = arith.constant 3.050000e+00 : f32
    %61 = vector.broadcast %cst_26 : f32 to vector<8x128xf32>
    %62 = arith.subf %60, %61 : vector<8x128xf32>
    %cst_27 = arith.constant 0.000000e+00 : f32
    %63 = vector.broadcast %cst_27 : f32 to vector<8x128xf32>
    %64 = arith.maximumf %62, %63 : vector<8x128xf32>
    %65 = arith.addf %59, %64 : vector<8x128xf32>
    %cst_28 = arith.constant 0.000000e+00 : f32
    %66 = vector.broadcast %cst_28 : f32 to vector<8x128xf32>
    %67 = arith.subf %66, %11 : vector<8x128xf32>
    %cst_29 = arith.constant 0.000000e+00 : f32
    %68 = vector.broadcast %cst_29 : f32 to vector<8x128xf32>
    %69 = arith.maximumf %67, %68 : vector<8x128xf32>
    %70 = arith.addf %65, %69 : vector<8x128xf32>
    %71 = vector.shape_cast %70 : vector<8x128xf32> to vector<1x8x128xf32>
    %cst_30 = arith.constant dense<0.000000e+00> : vector<1xf32>
    %72 = vector.multi_reduction <add>, %71, %cst_30 [1, 2] : vector<1x8x128xf32> to vector<1xf32>
    %73 = vector.shape_cast %72 : vector<1xf32> to vector<1x1x1xf32>
    %74 = vector.extract %73[0, 0, 0] : f32 from vector<1x1x1xf32>
    %75 = vector.broadcast %74 : f32 to vector<1x1xf32>
    %76 = tpu.iota {dimensions = array<i32: 1>} : vector<8x128xi32>
    %c0_i32 = arith.constant 0 : i32
    %77 = vector.broadcast %c0_i32 : i32 to vector<8x128xi32>
    %78 = arith.cmpi eq, %76, %77 : vector<8x128xi32>
    %cst_31 = arith.constant 0.000000e+00 : f32
    %79 = vector.shape_cast %26 : vector<1x1xf32> to vector<1x1xf32>
    %80 = vector.broadcast %79 : vector<1x1xf32> to vector<8x128xf32>
    %81 = vector.broadcast %cst_31 : f32 to vector<8x128xf32>
    %82 = arith.select %78, %80, %81 : vector<8x128xi1>, vector<8x128xf32>
    %c1_i32 = arith.constant 1 : i32
    %83 = vector.broadcast %c1_i32 : i32 to vector<8x128xi32>
    %84 = arith.cmpi eq, %76, %83 : vector<8x128xi32>
    %85 = vector.shape_cast %54 : vector<1x1xf32> to vector<1x1xf32>
    %86 = vector.broadcast %85 : vector<1x1xf32> to vector<8x128xf32>
    %87 = arith.select %84, %86, %82 : vector<8x128xi1>, vector<8x128xf32>
    %c2_i32 = arith.constant 2 : i32
    %88 = vector.broadcast %c2_i32 : i32 to vector<8x128xi32>
    %89 = arith.cmpi eq, %76, %88 : vector<8x128xi32>
    %90 = vector.shape_cast %75 : vector<1x1xf32> to vector<1x1xf32>
    %91 = vector.broadcast %90 : vector<1x1xf32> to vector<8x128xf32>
    %92 = arith.select %89, %91, %87 : vector<8x128xi1>, vector<8x128xf32>
    %c0_32 = arith.constant 0 : index
    %c0_33 = arith.constant 0 : index
    %c0_34 = arith.constant 0 : index
    %93 = vector.load %arg3[%c0_32, %c0_33, %c0_34] : memref<1x8x128xf32, #tpu.memory_space<vmem>>, vector<1x8x128xf32>
    %94 = vector.shape_cast %93 : vector<1x8x128xf32> to vector<8x128xf32>
    %95 = vector.shape_cast %92 : vector<8x128xf32> to vector<1x8x128xf32>
    tpu.vector_store %arg3[%c0_32, %c0_33, %c0_34], %95 {strides = array<i32>} : memref<1x8x128xf32, #tpu.memory_space<vmem>>, vector<1x8x128xf32>,
    return
  }
  func.func @transform_0(%arg0: i32) -> (i32, i32, i32) {
    %c0_i32 = arith.constant 0 : i32
    %c0_i32_0 = arith.constant 0 : i32
    %c0_i32_1 = arith.constant 0 : i32
    return %c0_i32, %arg0, %c0_i32_0 : i32, i32, i32
  }
  func.func @transform_1(%arg0: i32) -> (i32, i32, i32) {
    %c0_i32 = arith.constant 0 : i32
    %c0_i32_0 = arith.constant 0 : i32
    %c0_i32_1 = arith.constant 0 : i32
    return %c0_i32, %arg0, %c0_i32_0 : i32, i32, i32
  }
  func.func @transform_2(%arg0: i32) -> (i32, i32, i32) {
    %c0_i32 = arith.constant 0 : i32
    %c0_i32_0 = arith.constant 0 : i32
    %c0_i32_1 = arith.constant 0 : i32
    return %arg0, %c0_i32, %c0_i32_0 : i32, i32, i32
  }
}

</mosaic_0001>

<llo_original>
// kernel: tpu_custom_call.1
$region0: #{tpu_custom_call.1}
  #allocation0 [shape = 'u32[]', space=smem, size = 0x4, offset = 0x4, fixed_abs, tag = 'smem constant byte address 0x4 - core index']
  #allocation1 [shape = 'u32[144,128]{1,0:T(1,128)}', space=vmem, size = 0x12000, scoped, tag = 'internal scratch']
  %s0 = inlined_call_operand.hbm [shape: f32[3,8,128], index: 0, kind: input, shape index: {}]
  %s1 = inlined_call_operand.hbm [shape: f32[3,8,128], index: 1, kind: input, shape index: {}]
  %s2 = inlined_call_operand.hbm [shape: f32[1,8,128], index: 2, kind: output, shape index: {}]
  %s3 = sld [smem:[#allocation0]]
  $region26: #{tpu_custom_call.1} parent=0
    _
  %s5 = ssub.s32 1, %s3
  %s6 = scalar_select 0, %s5, %s3
  $region1: #{tpu_custom_call.1} parent=0
    #allocation2 [shape = 'u8[12288]{0}', space=vmem, size = 0x3000, scoped, tag = 'input window, operand 0, single buffered']
    #allocation3 [shape = 's32[1]{0}', space=sflag, size = 0x4, scoped, tag = 'scoped memory for tpu_custom_call.1']
    #allocation4 [shape = 's32[1]{0}', space=sflag, size = 0x4, scoped, tag = 'scoped memory for tpu_custom_call.1']
    #allocation5 [shape = 'u8[12288]{0}', space=vmem, size = 0x3000, scoped, tag = 'input window, operand 1, single buffered']
    #allocation6 [shape = 's32[1]{0}', space=sflag, size = 0x4, scoped, tag = 'scoped memory for tpu_custom_call.1']
    #allocation7 [shape = 'u8[4096]{0}', space=vmem, size = 0x1000, scoped, tag = 'output window, operand 0, single buffered']
    %7 = vsyncpa [#allocation3], 0
    %8 = vsyncpa [#allocation6], 0
    %9 = vsyncpa [#allocation4], 0
    // Predicated region
    $region2: #{tpu_custom_call.1} parent=1 // pred_check
      _
    $region3: #{tpu_custom_call.1} parent=1 // pred_check_branch
      %11 = sbr.rel (0) target = $region5
    $region4: #{tpu_custom_call.1} parent=1 // pred_region
      %s13 = ssub.s32 384, 384
      %14 = vsyncadd [#allocation3], %s13
      %s15 = sshll.u32 [#allocation2], 4
      %s16 = int_to_ptr.vmem [resolvable:$true] %s15
      %21 = dma.hbm_to_vmem [thread:$0]  %s0, 384, %s16, [#allocation3], 128, 128, 8
    $region5: #{tpu_custom_call.1} parent=1 // pred_fallthru
      _
    // Predicated region
    $region6: #{tpu_custom_call.1} parent=1 // pred_check
      _
    $region7: #{tpu_custom_call.1} parent=1 // pred_check_branch
      %23 = sbr.rel (0) target = $region9
    $region8: #{tpu_custom_call.1} parent=1 // pred_region
      %s25 = ssub.s32 384, 384
      %26 = vsyncadd [#allocation6], %s25
      %s27 = sshll.u32 [#allocation5], 4
      %s28 = int_to_ptr.vmem [resolvable:$true] %s27
      %33 = dma.hbm_to_vmem [thread:$0]  %s1, 384, %s28, [#allocation6], 128, 128, 8
    $region9: #{tpu_custom_call.1} parent=1 // pred_fallthru
      _
    // Predicated region
    $region10: #{tpu_custom_call.1} parent=1 // pred_check
      _
    $region11: #{tpu_custom_call.1} parent=1 // pred_check_branch
      %35 = sbr.rel (0) target = $region13
    $region12: #{tpu_custom_call.1} parent=1 // pred_region
      %36 = dma.done [#allocation3], 384
    $region13: #{tpu_custom_call.1} parent=1 // pred_fallthru
      _
    // Predicated region
    $region14: #{tpu_custom_call.1} parent=1 // pred_check
      _
    $region15: #{tpu_custom_call.1} parent=1 // pred_check_branch
      %38 = sbr.rel (0) target = $region17
    $region16: #{tpu_custom_call.1} parent=1 // pred_region
      %39 = dma.done [#allocation6], 384
    $region17: #{tpu_custom_call.1} parent=1 // pred_fallthru
      _
    %v40 = vld [vmem:[#allocation2] sm:$0xff]
    %s41 = scalar_lea.vmem [#allocation2], 8
    %v42 = vld [vmem:[%s41] sm:$0xff]
    %s43 = scalar_lea.vmem [#allocation2], 16
    %v44 = vld [vmem:[%s43] sm:$0xff]
    %v45 = vld [vmem:[#allocation5] sm:$0xff]
    %s46 = scalar_lea.vmem [#allocation5], 8
    %v47 = vld [vmem:[%s46] sm:$0xff]
    %s48 = scalar_lea.vmem [#allocation5], 16
    %v49 = vld [vmem:[%s48] sm:$0xff]
    %v50 = vmul.f32 %v40, %v40
    %v51 = vmul.f32 %v42, %v42
    %v52 = vadd.f32 %v50, %v51
    %v53 = vmul.f32 %v44, %v44
    %v54 = vadd.f32 %v52, %v53
    %v55 = vrsqrt.pop %v54
    %v56 = vmul.f32 %v54, %v55
    %vm57 = vcmp.eq.f32.partialorder %v54, inf
    %v58 = vsel %vm57, %v54, %v56
    %vm59 = vcmp.eq.f32.partialorder %v54, 0.0
    %v60 = vand.u32 %v54, 2147483648
    %v61 = vsel %vm59, %v60, %v58
    %v62 = vsub.f32 %v61, 137.0
    %v63 = vmax.f32 %v62, 0.0
    %64 = vadd.xlane.f32.xlu0 %v63
    %v65 = vpop.xlane.xlu0 %64
    %v66 = vrot.slane %v65, 4
    %v67 = vadd.f32 %v65, %v66
    %v68 = vrot.slane %v67, 2
    %v69 = vadd.f32 %v67, %v68
    %v70 = vrot.slane %v69, 1
    %v71 = vadd.f32 %v69, %v70
    %s72 = vtos %v71
    %73 = vrot.lane.b32.xlu0 %v40, 127
    %v74 = vpop.permute.xlu0 %73
    %v75 = vsub.f32 %v74, %v40
    %76 = vrot.lane.b32.xlu0 %v42, 127
    %v77 = vpop.permute.xlu0 %76
    %v78 = vsub.f32 %v77, %v42
    %79 = vrot.lane.b32.xlu0 %v44, 127
    %v80 = vpop.permute.xlu0 %79
    %v81 = vsub.f32 %v80, %v44
    %v82 = vmul.f32 %v75, %v75
    %v83 = vmul.f32 %v78, %v78
    %v84 = vadd.f32 %v82, %v83
    %v85 = vmul.f32 %v81, %v81
    %v86 = vadd.f32 %v84, %v85
    %v87 = vrsqrt.pop %v86
    %v88 = vmul.f32 %v86, %v87
    %vm89 = vcmp.eq.f32.partialorder %v86, inf
    %v90 = vsel %vm89, %v86, %v88
    %vm91 = vcmp.eq.f32.partialorder %v86, 0.0
    %v92 = vand.u32 %v86, 2147483648
    %v93 = vsel %vm91, %v92, %v90
    %v94 = vmul.f32 %v93, 30.0
    %v95 = vlaneseq
    %v96 = vand.u32 %v95, 127
    %vm97 = vcmp.lt.s32.totalorder %v96, 7
    %v98 = vsub.f32 %v94, 100.0
    %v99 = vmax.f32 %v98, 0.0
    %v100 = vsel %vm97, %v99, 0.0
    %101 = vadd.xlane.f32.xlu0 %v100
    %v102 = vpop.xlane.xlu0 %101
    %v103 = vrot.slane %v102, 4
    %v104 = vadd.f32 %v102, %v103
    %v105 = vrot.slane %v104, 2
    %v106 = vadd.f32 %v104, %v105
    %v107 = vrot.slane %v106, 1
    %v108 = vadd.f32 %v106, %v107
    %s109 = vtos %v108
    %v110 = vand.u32 2147483647, %v45
    %v111 = vsub.f32 %v110, 6.7
    %v112 = vmax.f32 %v111, 0.0
    %v113 = vand.u32 2147483647, %v47
    %v114 = vsub.f32 %v113, 3.05
    %v115 = vmax.f32 %v114, 0.0
    %v116 = vadd.f32 %v112, %v115
    %v117 = vsub.f32 0.0, %v49
    %v118 = vmax.f32 %v117, 0.0
    %v119 = vadd.f32 %v116, %v118
    %120 = vadd.xlane.f32.xlu0 %v119
    %v121 = vpop.xlane.xlu0 %120
    %v122 = vrot.slane %v121, 4
    %v123 = vadd.f32 %v121, %v122
    %v124 = vrot.slane %v123, 2
    %v125 = vadd.f32 %v123, %v124
    %v126 = vrot.slane %v125, 1
    %v127 = vadd.f32 %v125, %v126
    %s128 = vtos %v127
    %vm129 = vcmp.eq.s32.totalorder %v96, 0
    %v130 = vstv %s72
    %v131 = vsel %vm129, %v130, 0.0
    %vm132 = vcmp.eq.s32.totalorder %v96, 1
    %v133 = vstv %s109
    %v134 = vsel %vm132, %v133, %v131
    %vm135 = vcmp.eq.s32.totalorder %v96, 2
    %v136 = vstv %s128
    %v137 = vsel %vm135, %v136, %v134
    %138 = vst [vmem:[#allocation7] sm:$0xff] %v137
    // Predicated region
    $region18: #{tpu_custom_call.1} parent=1 // pred_check
      _
    $region19: #{tpu_custom_call.1} parent=1 // pred_check_branch
      %140 = sbr.rel (0) target = $region21
    $region20: #{tpu_custom_call.1} parent=1 // pred_region
      %s142 = ssub.s32 128, 128
      %143 = vsyncadd [#allocation4], %s142
      %s145 = sshll.u32 [#allocation7], 4
      %s146 = int_to_ptr.vmem [resolvable:$true] %s145
      %148 = dma.vmem_to_hbm [thread:$0]  %s146, 128, %s2, [#allocation4]
    $region21: #{tpu_custom_call.1} parent=1 // pred_fallthru
      _
    // Predicated region
    $region22: #{tpu_custom_call.1} parent=1 // pred_check
      _
    $region23: #{tpu_custom_call.1} parent=1 // pred_check_branch
      %150 = sbr.rel (0) target = $region25
    $region24: #{tpu_custom_call.1} parent=1 // pred_region
      %151 = dma.done [#allocation4], 128
    $region25: #{tpu_custom_call.1} parent=1 // pred_fallthru
      _
    %152 = vsyncpa [#allocation3], 1
    %153 = vsyncpa [#allocation6], 1
    %154 = vsyncpa [#allocation4], 1

</llo_original>
